<compile_context>
chip_gen: v7x
topology: tpu7x:2x2x1
jax: 0.10.0
libtpu: 0.0.40
codegen_flags: <defaults>
</compile_context>

<pallas_src>
import functools

import jax
import jax.numpy as jnp
from jax.experimental import pallas as pl
from jax.experimental.pallas import tpu as pltpu

_VMEM_LIMIT = 32 * 1024 * 1024  # explicit, same on v5e/v6e/v7x


# ----------------------------------------------------------------------------
# Pallas kernels
# ----------------------------------------------------------------------------
def _matmul_bias_kernel(x_ref, w_ref, b_ref, o_ref):
    # x: (tm, K) f32, w: (K, N) bf16, b: (1, N) f32 -> o: (tm, N) f32.
    # bf16 MXU operands, f32 accumulation; bias add in f32.
    o_ref[...] = (
        jnp.dot(x_ref[...].astype(jnp.bfloat16), w_ref[...],
                preferred_element_type=jnp.float32)
        + b_ref[...]
    ).astype(o_ref.dtype)


def _rnn_layer_kernel(seq_ref, w_ih_ref, w_hh_ref, bias_ref,
                      out_ref, hn_ref, h_scratch, *, tT, B, g):
    # seq_ref : (tT*B, IN) f32  time-major chunk of this layer's inputs
    # w_ih_ref: (IN, H)  bf16,  w_hh_ref: (H, H) bf16,  bias_ref: (1, H) f32
    # out_ref : (tT*B, H) f32 chunk of hidden states, hn_ref: (B, H) f32
    # h_scratch: VMEM (B, H) f32 hidden state carried across time chunks.
    i = pl.program_id(0)

    @pl.when(i == 0)
    def _():
        h_scratch[...] = jnp.zeros_like(h_scratch)  # self.hidden is None

    # Fused per-chunk gate projection (MXU-filling dot, bf16 operands, f32 acc).
    gates = (
        jnp.dot(seq_ref[...].astype(jnp.bfloat16), w_ih_ref[...],
                preferred_element_type=jnp.float32)
        + bias_ref[...]
    )  # (tT*B, H) f32, bias = b_ih + b_hh pre-summed

    w_hh = w_hh_ref[...]          # bf16, VMEM/vreg resident for the chunk
    h = h_scratch[...]            # (B, H) f32 carried hidden state

    # Serial time loop over this chunk; bounded at tT steps per invocation.
    # Steps are grouped so each out store covers whole (8,128) sublane tiles.
    t = 0
    while t < tT:                 # static Python grouping
        gg = min(g, tT - t)
        hs = []
        for j in range(gg):       # small static unroll (<= 8//B)
            r = (t + j) * B
            pre = gates[r:r + B, :] + jnp.dot(
                h.astype(jnp.bfloat16), w_hh,
                preferred_element_type=jnp.float32)
            h = jnp.tanh(pre)     # f32 elementwise / EUP
            hs.append(h)
        blk = hs[0] if gg == 1 else jnp.concatenate(hs, axis=0)
        out_ref[t * B:(t + gg) * B, :] = blk.astype(out_ref.dtype)
        t += gg

    h_scratch[...] = h            # carry hidden state into the next chunk

    @pl.when(i == pl.num_programs(0) - 1)
    def _():
        hn_ref[...] = h.astype(hn_ref.dtype)


# ----------------------------------------------------------------------------
# Wrappers
# ----------------------------------------------------------------------------
def matmul_bias_pallas(x2d, w_bf16, b, tm=512):
    """(M, K) f32 @ (K, N) bf16 + (1, N) f32, M tiled as a parallel grid axis."""
    M, K = x2d.shape
    N = w_bf16.shape[1]
    tm = min(M, tm)
    grid = (pl.cdiv(M, tm),)
    return pl.pallas_call(
        _matmul_bias_kernel,
        out_shape=jax.ShapeDtypeStruct((M, N), jnp.float32),
        grid=grid,
        in_specs=[
            pl.BlockSpec((tm, K), lambda i: (i, 0)),
            pl.BlockSpec((K, N), lambda i: (0, 0)),
            pl.BlockSpec((1, N), lambda i: (0, 0)),
        ],
        out_specs=pl.BlockSpec((tm, N), lambda i: (i, 0)),
        compiler_params=pltpu.CompilerParams(
            dimension_semantics=("parallel",),
            vmem_limit_bytes=_VMEM_LIMIT),
    )(x2d, w_bf16, b)


def _store_group(B):
    """Steps per coalesced store so each store spans whole 8-sublane tiles."""
    if B % 8 == 0:
        return 1
    if 8 % B == 0:
        return 8 // B
    return 1  # fall back to (correct) masked per-step stores


def _pick_time_chunk(T, B, g, max_rows=512):
    """Largest tT dividing T, multiple of g, with tT*B bounded (VMEM)."""
    cands = [d for d in range(1, T + 1)
             if T % d == 0 and d % g == 0 and d * B <= max_rows]
    return max(cands) if cands else T


def rnn_layer_pallas(seq2d, w_ih_bf16, w_hh_bf16, bias, T, B, tT=None):
    """One RNN layer: fused gate projection + time-chunked tanh recurrence."""
    TB, IN = seq2d.shape
    assert TB == T * B
    H = w_hh_bf16.shape[0]
    g = _store_group(B)
    if tT is None:
        tT = _pick_time_chunk(T, B, g)
    assert T % tT == 0, "time chunk must divide T"
    assert (tT * B) % 8 == 0 or tT * B == TB, "chunk rows must be 8-aligned"
    grid = (T // tT,)

    kernel = functools.partial(_rnn_layer_kernel, tT=tT, B=B, g=g)
    out, h_n = pl.pallas_call(
        kernel,
        out_shape=(
            jax.ShapeDtypeStruct((T * B, H), jnp.float32),
            jax.ShapeDtypeStruct((B, H), jnp.float32),
        ),
        grid=grid,
        in_specs=[
            pl.BlockSpec((tT * B, IN), lambda i: (i, 0)),   # seq chunk
            pl.BlockSpec((IN, H), lambda i: (0, 0)),        # W_ih (resident)
            pl.BlockSpec((H, H), lambda i: (0, 0)),         # W_hh (resident)
            pl.BlockSpec((1, H), lambda i: (0, 0)),         # bias (resident)
        ],
        out_specs=(
            pl.BlockSpec((tT * B, H), lambda i: (i, 0)),    # hidden chunk
            pl.BlockSpec((B, H), lambda i: (0, 0)),         # h_n (resident)
        ),
        scratch_shapes=[pltpu.VMEM((B, H), jnp.float32)],   # carried hidden
        compiler_params=pltpu.CompilerParams(
            dimension_semantics=("arbitrary",),             # serial recurrence
            vmem_limit_bytes=_VMEM_LIMIT),
    )(seq2d, w_ih_bf16, w_hh_bf16, bias)
    return out, h_n


def base_rnn_forward(params, x, tT=None):
    """x: (B, T, input_size) -> output (B, T, hidden_size), [h_n per layer]."""
    B, T, D_in = x.shape
    # One relayout of the (tiny) raw input to time-major; all later stages keep
    # time-major 2-D row order so there are no per-layer transposes.
    x_tm = jnp.transpose(x, (1, 0, 2)).reshape(T * B, D_in)

    # Input Linear on the whole sequence (hoisted, M-tiled parallel matmul).
    w_in_bf16 = params["w_in"].astype(jnp.bfloat16)
    seq = matmul_bias_pallas(x_tm, w_in_bf16, params["b_in"])    # (T*B, E) f32

    h_finals = []
    out2d = seq
    for layer in params["rnn_layers"]:
        bias = layer["b_ih"] + layer["b_hh"]                     # pre-summed
        out2d, h_n = rnn_layer_pallas(
            seq,
            layer["w_ih"].astype(jnp.bfloat16),
            layer["w_hh"].astype(jnp.bfloat16),
            bias, T, B, tT=tT)
        h_finals.append(h_n)
        seq = out2d                                              # next layer in

    H = params["rnn_layers"][-1]["w_hh"].shape[0]
    # TODO(synk): fold this final relayout into the last layer / consumer.
    output = jnp.transpose(out2d.reshape(T, B, H), (1, 0, 2))    # batch-first
    return output, h_finals


# ----------------------------------------------------------------------------
# Deterministic parameter init (mirrors init_weights): xavier_uniform with
# relu gain for the Linear, sigmoid gain (=1) for RNN weights, biases 0.25.
# Weights stored pre-transposed as (in, out) so kernels compute x @ W directly.
# ----------------------------------------------------------------------------
def xavier_uniform(key, shape, gain):
    fan_in, fan_out = shape[0], shape[1]
    limit = gain * jnp.sqrt(6.0 / (fan_in + fan_out))
    return jax.random.uniform(key, shape, jnp.float32, -limit, limit)


def make_params(key, input_size, embedding_size, hidden_size, num_layers):
    relu_gain = float(jnp.sqrt(2.0))
    sig_gain = 1.0
    keys = jax.random.split(key, 1 + 2 * num_layers)
    params = {
        "w_in": xavier_uniform(keys[0], (input_size, embedding_size), relu_gain),
        "b_in": jnp.zeros((1, embedding_size), jnp.float32),
        "rnn_layers": [],
    }
    in_dim = embedding_size
    for l in range(num_layers):
        w_ih = xavier_uniform(keys[1 + 2 * l], (in_dim, hidden_size), sig_gain)
        w_hh = xavier_uniform(keys[2 + 2 * l], (hidden_size, hidden_size), sig_gain)
        params["rnn_layers"].append({
            "w_ih": w_ih,
            "w_hh": w_hh,
            "b_ih": jnp.full((1, hidden_size), 0.25, jnp.float32),
            "b_hh": jnp.full((1, hidden_size), 0.25, jnp.float32),
        })
        in_dim = hidden_size
    return params


# ----------------------------------------------------------------------------
# References: pure f32 (torch semantics) and a bf16-operand mirror of the
# kernel numerics (bf16 dot inputs, f32 accumulation, f32 tanh).
# ----------------------------------------------------------------------------
def reference_forward_f32(params, x):
    B, T, D_in = x.shape
    h = x.reshape(B * T, D_in) @ params["w_in"] + params["b_in"]
    h = h.reshape(B, T, -1).transpose(1, 0, 2)  # (T, B, E)
    for layer in params["rnn_layers"]:
        H = layer["w_hh"].shape[0]

        def step(h_prev, x_t):
            h_new = jnp.tanh(x_t @ layer["w_ih"] + layer["b_ih"]
                             + h_prev @ layer["w_hh"] + layer["b_hh"])
            return h_new, h_new

        h0 = jnp.zeros((B, H), jnp.float32)
        _, h = jax.lax.scan(step, h0, h)
    return h.transpose(1, 0, 2)


def reference_forward_bf16(params, x):
    bf = lambda a: a.astype(jnp.bfloat16)
    B, T, D_in = x.shape
    h = (jnp.dot(bf(x.reshape(B * T, D_in)), bf(params["w_in"]),
                 preferred_element_type=jnp.float32) + params["b_in"])
    h = h.reshape(B, T, -1).transpose(1, 0, 2)  # (T, B, E) f32
    for layer in params["rnn_layers"]:
        H = layer["w_hh"].shape[0]
        w_ih, w_hh = bf(layer["w_ih"]), bf(layer["w_hh"])
        bias = layer["b_ih"] + layer["b_hh"]

        def step(h_prev, x_t):
            pre = (jnp.dot(bf(x_t), w_ih, preferred_element_type=jnp.float32)
                   + bias
                   + jnp.dot(bf(h_prev), w_hh,
                             preferred_element_type=jnp.float32))
            h_new = jnp.tanh(pre)
            return h_new, h_new

        h0 = jnp.zeros((B, H), jnp.float32)
        _, h = jax.lax.scan(step, h0, h)
    return h.transpose(1, 0, 2)


if __name__ == "__main__":
    B, T = 2, 16
    # E = H = 128 -> every block's last dim is lane-dense (multiple of 128).
    input_size, embedding_size, hidden_size, num_layers = 16, 128, 128, 2

    key = jax.random.PRNGKey(0)
    k_param, k_x = jax.random.split(key)
    params = make_params(k_param, input_size, embedding_size, hidden_size,
                         num_layers)
    x = jax.random.normal(k_x, (B, T, input_size), jnp.float32)

    # tT=4 -> grid of 4 time chunks per layer (exercises the carried-h scratch).
    out, h_finals = base_rnn_forward(params, x, tT=4)
    out = jax.block_until_ready(out)
    assert out.shape == (B, T, hidden_size)
    assert h_finals[-1].shape == (B, hidden_size)

    # Tight check against a reference mirroring the kernel numerics
    # (bf16 MXU operands, f32 accumulation / tanh).
    ref_bf16 = reference_forward_bf16(params, x)
    assert jnp.allclose(out, ref_bf16, atol=5e-3, rtol=5e-3)

    # Sanity check against the pure-f32 torch-semantics reference
    # (loosened for bf16 matmul operands, per review).
    ref_f32 = reference_forward_f32(params, x)
    assert jnp.allclose(out, ref_f32, atol=5e-2, rtol=5e-2)

    print("KERNEL_OK")
</pallas_src>

<mosaic_0001>
module attributes {stable_mosaic.version = 11 : i64} {
  func.func @_matmul_bias_kernel(%arg0: i32, %arg1: memref<32x16xf32, #tpu.memory_space<vmem>>, %arg2: memref<16x128xbf16, #tpu.memory_space<vmem>>, %arg3: memref<1x128xf32, #tpu.memory_space<vmem>>, %arg4: memref<32x128xf32, #tpu.memory_space<vmem>>) attributes {dimension_semantics = [#tpu.dimension_semantics<parallel>], iteration_bounds = array<i64: 1>, scalar_prefetch = 0 : i64, scratch_operands = 0 : i64, tpu.core_type = #tpu.core_type<tc>, window_params = [{transform_indices = @transform_0, window_bounds = array<i64: 32, 16>}, {pipeline_mode = #tpu.pipeline_mode<synchronous>, transform_indices = @transform_1, window_bounds = array<i64: 16, 128>}, {pipeline_mode = #tpu.pipeline_mode<synchronous>, transform_indices = @transform_2, window_bounds = array<i64: 1, 128>}, {transform_indices = @transform_3, window_bounds = array<i64: 32, 128>}]} {
    %c0 = arith.constant 0 : index
    %c0_0 = arith.constant 0 : index
    %0 = vector.load %arg1[%c0, %c0_0] : memref<32x16xf32, #tpu.memory_space<vmem>>, vector<32x16xf32>
    %1 = arith.truncf %0 : vector<32x16xf32> to vector<32x16xbf16>
    %c0_1 = arith.constant 0 : index
    %c0_2 = arith.constant 0 : index
    %2 = vector.load %arg2[%c0_1, %c0_2] : memref<16x128xbf16, #tpu.memory_space<vmem>>, vector<16x128xbf16>
    %cst = arith.constant dense<0.000000e+00> : vector<32x128xf32>
    %3 = tpu.matmul %1, %2, %cst {dimension_numbers = #tpu.dot_dimension_numbers<[1], [0], [0], [1], [0, 0, 1, 1], [], []>} : vector<32x16xbf16>, vector<16x128xbf16>, vector<32x128xf32> -> vector<32x128xf32>
    %c0_3 = arith.constant 0 : index
    %c0_4 = arith.constant 0 : index
    %4 = vector.load %arg3[%c0_3, %c0_4] : memref<1x128xf32, #tpu.memory_space<vmem>>, vector<1x128xf32>
    %5 = vector.broadcast %4 : vector<1x128xf32> to vector<32x128xf32>
    %6 = arith.addf %3, %5 : vector<32x128xf32>
    %c0_5 = arith.constant 0 : index
    %c0_6 = arith.constant 0 : index
    %7 = vector.load %arg4[%c0_5, %c0_6] : memref<32x128xf32, #tpu.memory_space<vmem>>, vector<32x128xf32>
    tpu.vector_store %arg4[%c0_5, %c0_6], %6 {strides = array<i32>} : memref<32x128xf32, #tpu.memory_space<vmem>>, vector<32x128xf32>,
    return
  }
  func.func @transform_0(%arg0: i32) -> (i32, i32) {
    %c0_i32 = arith.constant 0 : i32
    %c0_i32_0 = arith.constant 0 : i32
    return %arg0, %c0_i32 : i32, i32
  }
  func.func @transform_1(%arg0: i32) -> (i32, i32) {
    %c0_i32 = arith.constant 0 : i32
    %c0_i32_0 = arith.constant 0 : i32
    %c0_i32_1 = arith.constant 0 : i32
    return %c0_i32, %c0_i32_0 : i32, i32
  }
  func.func @transform_2(%arg0: i32) -> (i32, i32) {
    %c0_i32 = arith.constant 0 : i32
    %c0_i32_0 = arith.constant 0 : i32
    %c0_i32_1 = arith.constant 0 : i32
    return %c0_i32, %c0_i32_0 : i32, i32
  }
  func.func @transform_3(%arg0: i32) -> (i32, i32) {
    %c0_i32 = arith.constant 0 : i32
    %c0_i32_0 = arith.constant 0 : i32
    return %arg0, %c0_i32 : i32, i32
  }
}

</mosaic_0001>

<llo_original>
// kernel: tpu_custom_call.1
$region0: #{tpu_custom_call.1}
  #allocation0 [shape = 'u32[]', space=smem, size = 0x4, offset = 0x4, fixed_abs, tag = 'smem constant byte address 0x4 - core index']
  #allocation1 [shape = 'u32[144,128]{1,0:T(1,128)}', space=vmem, size = 0x12000, scoped, tag = 'internal scratch']
  %s0 = inlined_call_operand.vmem [shape: f32[32,16], index: 0, kind: input, shape index: {}]
  %s1 = inlined_call_operand.vmem [shape: bf16[16,128], index: 1, kind: input, shape index: {}]
  %s2 = inlined_call_operand.vmem [shape: f32[1,128], index: 2, kind: input, shape index: {}]
  %s3 = inlined_call_operand.hbm [shape: f32[32,128], index: 3, kind: output, shape index: {}]
  %s4 = sld [smem:[#allocation0]]
  $region22: #{tpu_custom_call.1} parent=0
    _
  %s6 = ssub.s32 1, %s4
  %s7 = scalar_select 0, %s6, %s4
  $region1: #{tpu_custom_call.1} parent=0
    #allocation2 [shape = 'u8[16384]{0}', space=vmem, size = 0x4000, scoped, tag = 'output window, operand 0, single buffered']
    #allocation3 [shape = 's32[1]{0}', space=sflag, size = 0x4, scoped, tag = 'scoped memory for tpu_custom_call.1']
    %8 = vsyncpa [#allocation3], 0
    // Predicated region
    $region2: #{tpu_custom_call.1} parent=1 // pred_check
      _
    $region3: #{tpu_custom_call.1} parent=1 // pred_check_branch
      %10 = sbr.rel (0) target = $region5
    $region4: #{tpu_custom_call.1} parent=1 // pred_region
      _
    $region5: #{tpu_custom_call.1} parent=1 // pred_fallthru
      _
    // Predicated region
    $region6: #{tpu_custom_call.1} parent=1 // pred_check
      _
    $region7: #{tpu_custom_call.1} parent=1 // pred_check_branch
      %12 = sbr.rel (0) target = $region9
    $region8: #{tpu_custom_call.1} parent=1 // pred_region
      _
    $region9: #{tpu_custom_call.1} parent=1 // pred_fallthru
      _
    // Predicated region
    $region10: #{tpu_custom_call.1} parent=1 // pred_check
      _
    $region11: #{tpu_custom_call.1} parent=1 // pred_check_branch
      %14 = sbr.rel (0) target = $region13
    $region12: #{tpu_custom_call.1} parent=1 // pred_region
      _
    $region13: #{tpu_custom_call.1} parent=1 // pred_fallthru
      _
    %v16 = vld [vmem:[%s0] sm:$0xff]
    %v17 = vld [vmem:[%s0 + $0x8] sm:$0xff]
    %v18 = vld [vmem:[%s0 + $0x10] sm:$0xff]
    %v19 = vld [vmem:[%s0 + $0x18] sm:$0xff]
    %v20 = vpack.c.bf16 %v17, %v16
    %v21 = vpack.c.bf16 %v19, %v18
    %v22 = vld [vmem:[%s1] sm:$0xf]
    %v23 = vld [vmem:[%s1 + $0x4] sm:$0xf]
    %v24 = vld [vmem:[%s2] sm:$0x1]
    %v26 = vlaneseq
    %v27 = vshrl.u32 %v26, 7
    %v28 = vsub.s32 0, %v27
    %v29 = vrot.slane %v24, %v28
    %v33 = vunpack.c.l.b16 %v22
    %v34 = vunpack.c.l.b16 %v23
    %v35 = vpack.c.b16 %v34, %v33
    %vm37 = vcmask 130048
    %v39 = vsel %vm37, %v20, 0
    %v42 = vsel %vm37, %v21, 0
    %44 = vmatprep.subr.bf16.mxu0 0
    %45 = vmatpush1.bf16.msra.mxu0 %v35
    %46 = vmatprep.subr.bf16.mxu0 0
    %47 = vmatpush1.bf16.msra.mxu0 0
    %48 = vmatprep.subr.bf16.mxu0 0
    %49 = vmatpush1.bf16.msra.mxu0 0
    %50 = vmatprep.subr.bf16.mxu0 0
    %51 = vmatpush1.bf16.msra.mxu0 0
    %52 = vmatprep.subr.bf16.mxu0 0
    %53 = vmatpush1.bf16.msra.mxu0 0
    %54 = vmatprep.subr.bf16.mxu0 0
    %55 = vmatpush1.bf16.msra.mxu0 0
    %56 = vmatprep.subr.bf16.mxu0 0
    %57 = vmatpush1.bf16.msra.mxu0 0
    %58 = vmatprep.subr.bf16.mxu0 0
    %59 = vmatpush1.bf16.msra.mxu0 0
    %60 = vmatprep.subr.bf16.mxu0 0
    %61 = vmatpush1.bf16.msra.mxu0 0
    %62 = vmatprep.subr.bf16.mxu0 0
    %63 = vmatpush1.bf16.msra.mxu0 0
    %64 = vmatprep.subr.bf16.mxu0 0
    %65 = vmatpush1.bf16.msra.mxu0 0
    %66 = vmatprep.subr.bf16.mxu0 0
    %67 = vmatpush1.bf16.msra.mxu0 0
    %68 = vmatprep.subr.bf16.mxu0 0
    %69 = vmatpush1.bf16.msra.mxu0 0
    %70 = vmatprep.subr.bf16.mxu0 0
    %71 = vmatpush1.bf16.msra.mxu0 0
    %72 = vmatprep.subr.bf16.mxu0 0
    %73 = vmatpush1.bf16.msra.mxu0 0
    %74 = vmatprep.subr.bf16.mxu0 0
    %75 = vmatpush1.bf16.msra.mxu0 0
    %76 = vmatprep.mubr.bf16.mxu0 0
    %77 = vmatmul.mubr.bf16.gmra.mrb[0].mxu0 %v39
    %v78 = vpop.f32.mrb[0].mxu0
    %v79 = vadd.f32 %v29, %v78
    %v80 = vpop.f32.mrb[0].mxu0
    %v81 = vpop.f32.mrb[0].mxu0
    %v82 = vadd.f32 %v29, %v81
    %v83 = vpop.f32.mrb[0].mxu0
    %84 = vmatprep.mubr.bf16.mxu0 0
    %85 = vmatmul.mubr.bf16.gmra.mrb[0].mxu0 %v42
    %v86 = vpop.f32.mrb[0].mxu0
    %v87 = vadd.f32 %v29, %v86
    %v88 = vpop.f32.mrb[0].mxu0
    %v89 = vpop.f32.mrb[0].mxu0
    %v90 = vadd.f32 %v29, %v89
    %v91 = vpop.f32.mrb[0].mxu0
    %92 = vdwg.mxu0
    %93 = vst [vmem:[#allocation2] sm:$0xff] %v79
    %94 = vst [vmem:[#allocation2 + $0x8] sm:$0xff] %v82
    %95 = vst [vmem:[#allocation2 + $0x10] sm:$0xff] %v87
    %96 = vst [vmem:[#allocation2 + $0x18] sm:$0xff] %v90
    // Predicated region
    $region14: #{tpu_custom_call.1} parent=1 // pred_check
      _
    $region15: #{tpu_custom_call.1} parent=1 // pred_check_branch
      %98 = sbr.rel (0) target = $region17
    $region16: #{tpu_custom_call.1} parent=1 // pred_region
      %s100 = ssub.s32 512, 512
      %101 = vsyncadd [#allocation3], %s100
      %s102 = sshll.u32 [#allocation2], 4
      %s103 = int_to_ptr.vmem [resolvable:$true] %s102
      %108 = dma.vmem_to_hbm [thread:$0]  %s103, 512, %s3, [#allocation3], 128, 128, 8
    $region17: #{tpu_custom_call.1} parent=1 // pred_fallthru
      _
    // Predicated region
    $region18: #{tpu_custom_call.1} parent=1 // pred_check
      _
    $region19: #{tpu_custom_call.1} parent=1 // pred_check_branch
      %110 = sbr.rel (0) target = $region21
    $region20: #{tpu_custom_call.1} parent=1 // pred_region
      %111 = dma.done [#allocation3], 512
    $region21: #{tpu_custom_call.1} parent=1 // pred_fallthru
      _
    %112 = vsyncpa [#allocation3], 1

</llo_original>
